<compile_context>
chip_gen: v7x
topology: tpu7x:2x2x1
jax: 0.10.0
libtpu: 0.0.40
codegen_flags: <defaults>
</compile_context>

<pallas_src>
import functools

import jax
import jax.numpy as jnp
from jax.experimental import pallas as pl
from jax.experimental.pallas import tpu as pltpu


def _round_up(x, m):
    return ((x + m - 1) // m) * m


def _sage_kernel(adj_ref, hsrc_ref, hdst_ref, wd_ref, wn_ref, b_ref,
                 out_ref, acc_ref, deg_ref, *, in_feat, fuse_degree):
    # adj_ref : (tile_n, tile_k)   int8 adjacency block (dst rows x src cols)
    # hsrc_ref: (tile_k, f_blk)    bf16 src features (+ ones col if fused)
    # hdst_ref: (tile_n, in_feat)  bf16 dst features for this tile
    # wd_ref  : (in_feat, out_p)   bf16 Linear weight, h_dst half (transposed)
    # wn_ref  : (in_feat, out_p)   bf16 Linear weight, h_N half (transposed)
    # b_ref   : (1, out_p)         f32 bias
    # out_ref : (tile_n, out_p)    f32 output tile (lane-dense)
    # acc_ref : (tile_n, f_blk)    f32 accumulator (sum of neighbor features)
    # deg_ref : (tile_n, 128)      f32 degree accumulator (non-fused path)
    k = pl.program_id(1)

    @pl.when(k == 0)
    def _init():
        acc_ref[...] = jnp.zeros_like(acc_ref)
        if not fuse_degree:
            deg_ref[...] = jnp.zeros_like(deg_ref)

    # copy_u + sum over this K tile.  int8 -> bf16 upcast is VPU work hidden
    # under the DMA-bound stream; accumulation stays in f32.
    adj_blk = adj_ref[...].astype(jnp.bfloat16)
    acc_ref[...] += jnp.dot(adj_blk, hsrc_ref[...],
                            preferred_element_type=jnp.float32)

    if not fuse_degree:
        # Degree via XLU cross-lane row-sum (f32-exact for 0/1 entries).
        deg_ref[...] += jnp.sum(adj_blk.astype(jnp.float32),
                                axis=1, keepdims=True)

    @pl.when(k == pl.num_programs(1) - 1)
    def _finalize():
        acc = acc_ref[...]
        if fuse_degree:
            deg = acc[:, in_feat:in_feat + 1]     # degree from ones column
        else:
            deg = deg_ref[:, 0:1]
        # DGL fn.mean yields 0 for zero in-degree nodes; exact f32 division
        # (runs once per dst tile, cost negligible).
        h_n = jnp.where(deg > 0.0,
                        acc[:, :in_feat] / jnp.maximum(deg, 1.0),
                        0.0)
        # linear(cat([h_dst, h_N])) as two bf16 dots (no lane concat).
        out = (jnp.dot(hdst_ref[...], wd_ref[...],
                       preferred_element_type=jnp.float32)
               + jnp.dot(h_n.astype(jnp.bfloat16), wn_ref[...],
                         preferred_element_type=jnp.float32)
               + b_ref[...])
        out_ref[...] = out.astype(out_ref.dtype)


def sage_conv_forward(adj, h_src, h_dst, weight, bias, *,
                      tile_n=512, tile_k=4096):
    """adj: (N_dst, N_src) 0/1 (any dtype; int8 preferred); h_src: (N_src, F);
    h_dst: (N_dst, F); weight: (out_feat, 2*F) as in nn.Linear; bias: (out_feat,)."""
    n_dst, n_src = adj.shape
    in_feat = h_src.shape[1]
    out_feat = weight.shape[0]

    # Tile selection: big tiles to amortize per-step overhead, shrunk for
    # small graphs so we do not over-pad.  Multiples of 32 keep int8 sublane
    # tiling happy on every generation.
    tile_n = min(tile_n, _round_up(n_dst, 32))
    # v7x has 2 TensorCores sharing the "parallel" dst axis: for non-tiny
    # graphs prefer >=2 dst tiles over one giant tile.
    if n_dst > 256 and _round_up(n_dst, tile_n) // tile_n < 2:
        tile_n = _round_up((n_dst + 1) // 2, 32)
    tile_k = min(tile_k, _round_up(n_src, 128))
    n_dst_p = _round_up(n_dst, tile_n)
    n_src_p = _round_up(n_src, tile_k)

    out_p = _round_up(out_feat, 128)          # lane-dense output
    f_blk = _round_up(in_feat, 128)           # lane-padded src feature block
    # Fuse degree into the aggregation matmul only when the ones column fits
    # inside the existing lane padding (i.e. it is free).
    fuse_degree = (in_feat % 128) != 0

    # Adjacency: int8 in HBM.  Skip the padded re-materialization when the
    # caller already hands us an int8, tile-aligned adjacency.
    if adj.dtype == jnp.int8 and adj.shape == (n_dst_p, n_src_p):
        adj_p = adj
    else:
        adj_p = jnp.zeros((n_dst_p, n_src_p), jnp.int8)
        adj_p = adj_p.at[:n_dst, :n_src].set(adj.astype(jnp.int8))

    # Src features (bf16, lane-padded); ones column -> degree (exact in f32).
    hsrc_p = jnp.zeros((n_src_p, f_blk), jnp.bfloat16)
    hsrc_p = hsrc_p.at[:n_src, :in_feat].set(h_src.astype(jnp.bfloat16))
    if fuse_degree:
        hsrc_p = hsrc_p.at[:n_src, in_feat].set(1.0)

    # Dst features (bf16).
    hdst_p = jnp.zeros((n_dst_p, in_feat), jnp.bfloat16)
    hdst_p = hdst_p.at[:n_dst, :].set(h_dst.astype(jnp.bfloat16))

    # Linear weight split into the h_dst half and the h_N half, transposed
    # and lane-padded (bf16 MXU operands, f32 accumulation + bias).
    w = jnp.asarray(weight, jnp.float32)
    w_dst = jnp.zeros((in_feat, out_p), jnp.bfloat16)
    w_dst = w_dst.at[:, :out_feat].set(w[:, :in_feat].T.astype(jnp.bfloat16))
    w_n = jnp.zeros((in_feat, out_p), jnp.bfloat16)
    w_n = w_n.at[:, :out_feat].set(w[:, in_feat:].T.astype(jnp.bfloat16))
    b_p = jnp.zeros((1, out_p), jnp.float32)
    b_p = b_p.at[0, :out_feat].set(jnp.asarray(bias, jnp.float32))

    grid = (n_dst_p // tile_n, n_src_p // tile_k)   # reduction (K) axis last
    kernel = functools.partial(_sage_kernel, in_feat=in_feat,
                               fuse_degree=fuse_degree)

    out = pl.pallas_call(
        kernel,
        out_shape=jax.ShapeDtypeStruct((n_dst_p, out_p), jnp.float32),
        grid_spec=pltpu.PrefetchScalarGridSpec(
            num_scalar_prefetch=0,
            grid=grid,
            in_specs=[
                pl.BlockSpec((tile_n, tile_k), lambda i, k: (i, k)),    # adj
                pl.BlockSpec((tile_k, f_blk), lambda i, k: (k, 0)),     # h_src
                pl.BlockSpec((tile_n, in_feat), lambda i, k: (i, 0)),   # h_dst
                pl.BlockSpec((in_feat, out_p), lambda i, k: (0, 0)),    # W_dst
                pl.BlockSpec((in_feat, out_p), lambda i, k: (0, 0)),    # W_n
                pl.BlockSpec((1, out_p), lambda i, k: (0, 0)),          # bias
            ],
            out_specs=pl.BlockSpec((tile_n, out_p), lambda i, k: (i, 0)),
            scratch_shapes=[
                pltpu.VMEM((tile_n, f_blk), jnp.float32),   # feature acc
                pltpu.VMEM((tile_n, 128), jnp.float32),     # degree acc
            ],
        ),
        compiler_params=pltpu.CompilerParams(
            dimension_semantics=("parallel", "arbitrary"),
            # Big enough for 512x4096 int8 adj + 4096 x f_blk bf16 h_src
            # double buffers, while staying under v7x's 64 MiB physical VMEM.
            vmem_limit_bytes=48 * 1024 * 1024,
        ),
    )(adj_p, hsrc_p, hdst_p, w_dst, w_n, b_p)
    return out[:n_dst, :out_feat]


def sage_conv_reference(adj, h_src, h_dst, weight, bias):
    adj = adj.astype(jnp.float32)
    deg = adj.sum(axis=-1, keepdims=True)
    agg = adj @ h_src
    h_n = jnp.where(deg > 0.0, agg / jnp.maximum(deg, 1.0), 0.0)
    h_total = jnp.concatenate([h_dst, h_n], axis=1)
    return h_total @ weight.T + bias


def _run_case(key, n_dst, n_src, in_feat, out_feat, adj_dtype):
    k_adj, k_hs, k_hd, k_w, k_b = jax.random.split(key, 5)
    adj = jax.random.bernoulli(k_adj, p=0.2, shape=(n_dst, n_src)).astype(adj_dtype)
    h_src = jax.random.normal(k_hs, (n_src, in_feat), dtype=jnp.float32)
    h_dst = jax.random.normal(k_hd, (n_dst, in_feat), dtype=jnp.float32)
    bound = 1.0 / (2.0 * in_feat) ** 0.5
    weight = jax.random.uniform(k_w, (out_feat, 2 * in_feat),
                                minval=-bound, maxval=bound, dtype=jnp.float32)
    bias = jax.random.uniform(k_b, (out_feat,),
                              minval=-bound, maxval=bound, dtype=jnp.float32)

    out = sage_conv_forward(adj, h_src, h_dst, weight, bias)
    out = jax.block_until_ready(out)
    ref = sage_conv_reference(adj, h_src, h_dst, weight, bias)
    assert out.shape == (n_dst, out_feat)
    # bf16 feature / weight streaming -> loosened tolerance vs pure-f32 ref.
    assert jnp.allclose(out, ref, atol=5e-2, rtol=5e-2), (
        float(jnp.max(jnp.abs(out - ref))))


if __name__ == "__main__":
    key = jax.random.PRNGKey(0)
    k1, k2 = jax.random.split(key, 2)

    # Case 1: homogeneous 128-node graph, int8 tile-aligned adjacency
    # (no wrapper copy), fused ones-column degree path.
    _run_case(k1, n_dst=128, n_src=128, in_feat=16, out_feat=32,
              adj_dtype=jnp.int8)

    # Case 2: bipartite 96x80 graph, f32 adjacency (exercises pad/cast path),
    # in_feat % 128 == 0 -> separate degree-accumulator path.
    _run_case(k2, n_dst=96, n_src=80, in_feat=128, out_feat=64,
              adj_dtype=jnp.float32)

    print("KERNEL_OK")
</pallas_src>

<mosaic_0001>
module attributes {stable_mosaic.version = 11 : i64} {
  func.func @_sage_kernel(%arg0: i32, %arg1: i32, %arg2: memref<128x128xi8, #tpu.memory_space<vmem>>, %arg3: memref<128x128xbf16, #tpu.memory_space<vmem>>, %arg4: memref<128x16xbf16, #tpu.memory_space<vmem>>, %arg5: memref<16x128xbf16, #tpu.memory_space<vmem>>, %arg6: memref<16x128xbf16, #tpu.memory_space<vmem>>, %arg7: memref<1x128xf32, #tpu.memory_space<vmem>>, %arg8: memref<128x128xf32, #tpu.memory_space<vmem>>, %arg9: memref<128x128xf32, #tpu.memory_space<vmem>>, %arg10: memref<128x128xf32, #tpu.memory_space<vmem>>) attributes {dimension_semantics = [#tpu.dimension_semantics<parallel>, #tpu.dimension_semantics<arbitrary>], iteration_bounds = array<i64: 1, 1>, scalar_prefetch = 0 : i64, scratch_operands = 2 : i64, tpu.core_type = #tpu.core_type<tc>, window_params = [{transform_indices = @transform_0, window_bounds = array<i64: 128, 128>}, {transform_indices = @transform_1, window_bounds = array<i64: 128, 128>}, {transform_indices = @transform_2, window_bounds = array<i64: 128, 16>}, {pipeline_mode = #tpu.pipeline_mode<synchronous>, transform_indices = @transform_3, window_bounds = array<i64: 16, 128>}, {pipeline_mode = #tpu.pipeline_mode<synchronous>, transform_indices = @transform_4, window_bounds = array<i64: 16, 128>}, {pipeline_mode = #tpu.pipeline_mode<synchronous>, transform_indices = @transform_5, window_bounds = array<i64: 1, 128>}, {transform_indices = @transform_6, window_bounds = array<i64: 128, 128>}]} {
    %c0_i32 = arith.constant 0 : i32
    %0 = arith.cmpi eq, %arg1, %c0_i32 : i32
    %1 = arith.extui %0 : i1 to i32
    %c0_i32_0 = arith.constant 0 : i32
    %2 = arith.cmpi ne, %1, %c0_i32_0 : i32
    scf.if %2 {
      %cst_10 = arith.constant 0.000000e+00 : f32
      %13 = vector.broadcast %cst_10 : f32 to vector<128x128xf32>
      %c0_11 = arith.constant 0 : index
      %c0_12 = arith.constant 0 : index
      %14 = vector.load %arg9[%c0_11, %c0_12] : memref<128x128xf32, #tpu.memory_space<vmem>>, vector<128x128xf32>
      tpu.vector_store %arg9[%c0_11, %c0_12], %13 {strides = array<i32>} : memref<128x128xf32, #tpu.memory_space<vmem>>, vector<128x128xf32>,
    } else {
    }
    %c0 = arith.constant 0 : index
    %c0_1 = arith.constant 0 : index
    %3 = vector.load %arg2[%c0, %c0_1] : memref<128x128xi8, #tpu.memory_space<vmem>>, vector<128x128xi8>
    %4 = arith.sitofp %3 : vector<128x128xi8> to vector<128x128xbf16>
    %c0_2 = arith.constant 0 : index
    %c0_3 = arith.constant 0 : index
    %5 = vector.load %arg9[%c0_2, %c0_3] : memref<128x128xf32, #tpu.memory_space<vmem>>, vector<128x128xf32>
    %c0_4 = arith.constant 0 : index
    %c0_5 = arith.constant 0 : index
    %6 = vector.load %arg3[%c0_4, %c0_5] : memref<128x128xbf16, #tpu.memory_space<vmem>>, vector<128x128xbf16>
    %cst = arith.constant dense<0.000000e+00> : vector<128x128xf32>
    %7 = tpu.matmul %4, %6, %cst {dimension_numbers = #tpu.dot_dimension_numbers<[1], [0], [0], [1], [0, 0, 1, 1], [], []>} : vector<128x128xbf16>, vector<128x128xbf16>, vector<128x128xf32> -> vector<128x128xf32>
    %8 = arith.addf %5, %7 : vector<128x128xf32>
    %c0_6 = arith.constant 0 : index
    %c0_7 = arith.constant 0 : index
    %9 = vector.load %arg9[%c0_6, %c0_7] : memref<128x128xf32, #tpu.memory_space<vmem>>, vector<128x128xf32>
    tpu.vector_store %arg9[%c0_6, %c0_7], %8 {strides = array<i32>} : memref<128x128xf32, #tpu.memory_space<vmem>>, vector<128x128xf32>,
    %c0_i32_8 = arith.constant 0 : i32
    %10 = arith.cmpi eq, %arg1, %c0_i32_8 : i32
    %11 = arith.extui %10 : i1 to i32
    %c0_i32_9 = arith.constant 0 : i32
    %12 = arith.cmpi ne, %11, %c0_i32_9 : i32
    scf.if %12 {
      %c0_10 = arith.constant 0 : index
      %c0_11 = arith.constant 0 : index
      %13 = vector.load %arg9[%c0_10, %c0_11] : memref<128x128xf32, #tpu.memory_space<vmem>>, vector<128x128xf32>
      %14 = vector.extract_strided_slice %13 {offsets = [0, 16], sizes = [128, 1], strides = [1, 1]} : vector<128x128xf32> to vector<128x1xf32>
      %cst_12 = arith.constant 0.000000e+00 : f32
      %15 = vector.broadcast %cst_12 : f32 to vector<128x1xf32>
      %16 = arith.cmpf ogt, %14, %15 : vector<128x1xf32>
      %17 = vector.extract_strided_slice %13 {offsets = [0, 0], sizes = [128, 16], strides = [1, 1]} : vector<128x128xf32> to vector<128x16xf32>
      %cst_13 = arith.constant 1.000000e+00 : f32
      %18 = vector.broadcast %cst_13 : f32 to vector<128x1xf32>
      %19 = arith.maximumf %14, %18 : vector<128x1xf32>
      %20 = vector.broadcast %19 : vector<128x1xf32> to vector<128x16xf32>
      %21 = arith.divf %17, %20 : vector<128x16xf32>
      %cst_14 = arith.constant 0.000000e+00 : f32
      %22 = vector.shape_cast %16 : vector<128x1xi1> to vector<128x1xi1>
      %23 = vector.broadcast %22 : vector<128x1xi1> to vector<128x16xi1>
      %24 = vector.broadcast %cst_14 : f32 to vector<128x16xf32>
      %25 = arith.select %23, %21, %24 : vector<128x16xi1>, vector<128x16xf32>
      %c0_15 = arith.constant 0 : index
      %c0_16 = arith.constant 0 : index
      %26 = vector.load %arg4[%c0_15, %c0_16] : memref<128x16xbf16, #tpu.memory_space<vmem>>, vector<128x16xbf16>
      %c0_17 = arith.constant 0 : index
      %c0_18 = arith.constant 0 : index
      %27 = vector.load %arg5[%c0_17, %c0_18] : memref<16x128xbf16, #tpu.memory_space<vmem>>, vector<16x128xbf16>
      %cst_19 = arith.constant dense<0.000000e+00> : vector<128x128xf32>
      %28 = tpu.matmul %26, %27, %cst_19 {dimension_numbers = #tpu.dot_dimension_numbers<[1], [0], [0], [1], [0, 0, 1, 1], [], []>} : vector<128x16xbf16>, vector<16x128xbf16>, vector<128x128xf32> -> vector<128x128xf32>
      %29 = arith.truncf %25 : vector<128x16xf32> to vector<128x16xbf16>
      %c0_20 = arith.constant 0 : index
      %c0_21 = arith.constant 0 : index
      %30 = vector.load %arg6[%c0_20, %c0_21] : memref<16x128xbf16, #tpu.memory_space<vmem>>, vector<16x128xbf16>
      %cst_22 = arith.constant dense<0.000000e+00> : vector<128x128xf32>
      %31 = tpu.matmul %29, %30, %cst_22 {dimension_numbers = #tpu.dot_dimension_numbers<[1], [0], [0], [1], [0, 0, 1, 1], [], []>} : vector<128x16xbf16>, vector<16x128xbf16>, vector<128x128xf32> -> vector<128x128xf32>
      %32 = arith.addf %28, %31 : vector<128x128xf32>
      %c0_23 = arith.constant 0 : index
      %c0_24 = arith.constant 0 : index
      %33 = vector.load %arg7[%c0_23, %c0_24] : memref<1x128xf32, #tpu.memory_space<vmem>>, vector<1x128xf32>
      %34 = vector.broadcast %33 : vector<1x128xf32> to vector<128x128xf32>
      %35 = arith.addf %32, %34 : vector<128x128xf32>
      %c0_25 = arith.constant 0 : index
      %c0_26 = arith.constant 0 : index
      %36 = vector.load %arg8[%c0_25, %c0_26] : memref<128x128xf32, #tpu.memory_space<vmem>>, vector<128x128xf32>
      tpu.vector_store %arg8[%c0_25, %c0_26], %35 {strides = array<i32>} : memref<128x128xf32, #tpu.memory_space<vmem>>, vector<128x128xf32>,
    } else {
    }
    return
  }
  func.func @transform_0(%arg0: i32, %arg1: i32) -> (i32, i32) {
    %c0_i32 = arith.constant 0 : i32
    return %arg0, %arg1 : i32, i32
  }
  func.func @transform_1(%arg0: i32, %arg1: i32) -> (i32, i32) {
    %c0_i32 = arith.constant 0 : i32
    %c0_i32_0 = arith.constant 0 : i32
    return %arg1, %c0_i32 : i32, i32
  }
  func.func @transform_2(%arg0: i32, %arg1: i32) -> (i32, i32) {
    %c0_i32 = arith.constant 0 : i32
    %c0_i32_0 = arith.constant 0 : i32
    return %arg0, %c0_i32 : i32, i32
  }
  func.func @transform_3(%arg0: i32, %arg1: i32) -> (i32, i32) {
    %c0_i32 = arith.constant 0 : i32
    %c0_i32_0 = arith.constant 0 : i32
    %c0_i32_1 = arith.constant 0 : i32
    return %c0_i32, %c0_i32_0 : i32, i32
  }
  func.func @transform_4(%arg0: i32, %arg1: i32) -> (i32, i32) {
    %c0_i32 = arith.constant 0 : i32
    %c0_i32_0 = arith.constant 0 : i32
    %c0_i32_1 = arith.constant 0 : i32
    return %c0_i32, %c0_i32_0 : i32, i32
  }
  func.func @transform_5(%arg0: i32, %arg1: i32) -> (i32, i32) {
    %c0_i32 = arith.constant 0 : i32
    %c0_i32_0 = arith.constant 0 : i32
    %c0_i32_1 = arith.constant 0 : i32
    return %c0_i32, %c0_i32_0 : i32, i32
  }
  func.func @transform_6(%arg0: i32, %arg1: i32) -> (i32, i32) {
    %c0_i32 = arith.constant 0 : i32
    %c0_i32_0 = arith.constant 0 : i32
    return %arg0, %c0_i32 : i32, i32
  }
}

</mosaic_0001>

<llo_original>
// kernel: tpu_custom_call.1
$region0: #{tpu_custom_call.1}
  #allocation0 [shape = 'u32[]', space=smem, size = 0x4, offset = 0x4, fixed_abs, tag = 'smem constant byte address 0x4 - core index']
  #allocation1 [shape = 'u32[144,128]{1,0:T(1,128)}', space=vmem, size = 0x12000, scoped, tag = 'internal scratch']
  #allocation2 [shape = 'f32[128,128]{1,0:T(8,128)}', space=vmem, size = 0x10000, scoped, tag = 'scratch operand']
  #allocation3 [shape = 'f32[128,128]{1,0:T(8,128)}', space=vmem, size = 0x10000, scoped, tag = 'scratch operand']
  %s0 = inlined_call_operand.hbm [shape: s8[128,128], index: 0, kind: input, shape index: {}]
  %s1 = inlined_call_operand.vmem [shape: bf16[128,128], index: 1, kind: input, shape index: {}]
  %s2 = inlined_call_operand.vmem [shape: bf16[128,16], index: 2, kind: input, shape index: {}]
  %s3 = inlined_call_operand.vmem [shape: bf16[16,128], index: 3, kind: input, shape index: {}]
  %s4 = inlined_call_operand.vmem [shape: bf16[16,128], index: 4, kind: input, shape index: {}]
  %s5 = inlined_call_operand.vmem [shape: f32[1,128], index: 5, kind: input, shape index: {}]
  %s6 = inlined_call_operand.hbm [shape: f32[128,128], index: 6, kind: output, shape index: {}]
  %s7 = sld [smem:[#allocation0]]
  $region46: #{tpu_custom_call.1} parent=0
    _
  %s9 = ssub.s32 1, %s7
  %s10 = scalar_select 0, %s9, %s7
  $region1: #{tpu_custom_call.1} parent=0
    #allocation4 [shape = 'u8[16384]{0}', space=vmem, size = 0x4000, scoped, tag = 'input window, operand 0, single buffered']
    #allocation5 [shape = 's32[1]{0}', space=sflag, size = 0x4, scoped, tag = 'scoped memory for tpu_custom_call.1']
    #allocation6 [shape = 's32[1]{0}', space=sflag, size = 0x4, scoped, tag = 'scoped memory for tpu_custom_call.1']
    #allocation7 [shape = 'u8[65536]{0}', space=vmem, size = 0x10000, scoped, tag = 'output window, operand 0, single buffered']
    %11 = vsyncpa [#allocation5], 0
    %12 = vsyncpa [#allocation6], 0
    // Predicated region
    $region2: #{tpu_custom_call.1} parent=1 // pred_check
      _
    $region3: #{tpu_custom_call.1} parent=1 // pred_check_branch
      %14 = sbr.rel (0) target = $region5
    $region4: #{tpu_custom_call.1} parent=1 // pred_region
      %s16 = ssub.s32 512, 512
      %17 = vsyncadd [#allocation5], %s16
      %s18 = sshll.u32 [#allocation4], 4
      %s19 = int_to_ptr.vmem [resolvable:$true] %s18
      %24 = dma.hbm_to_vmem [thread:$0]  %s0, 512, %s19, [#allocation5], 128, 128, 8
    $region5: #{tpu_custom_call.1} parent=1 // pred_fallthru
      _
    // Predicated region
    $region6: #{tpu_custom_call.1} parent=1 // pred_check
      _
    $region7: #{tpu_custom_call.1} parent=1 // pred_check_branch
      %26 = sbr.rel (0) target = $region9
    $region8: #{tpu_custom_call.1} parent=1 // pred_region
      _
    $region9: #{tpu_custom_call.1} parent=1 // pred_fallthru
      _
    // Predicated region
    $region10: #{tpu_custom_call.1} parent=1 // pred_check
      _
    $region11: #{tpu_custom_call.1} parent=1 // pred_check_branch
      %28 = sbr.rel (0) target = $region13
    $region12: #{tpu_custom_call.1} parent=1 // pred_region
      _
    $region13: #{tpu_custom_call.1} parent=1 // pred_fallthru
      _
    // Predicated region
    $region14: #{tpu_custom_call.1} parent=1 // pred_check
      _
    $region15: #{tpu_custom_call.1} parent=1 // pred_check_branch
      %30 = sbr.rel (0) target = $region17
    $region16: #{tpu_custom_call.1} parent=1 // pred_region
      _
    $region17: #{tpu_custom_call.1} parent=1 // pred_fallthru
      _
    // Predicated region
    $region18: #{tpu_custom_call.1} parent=1 // pred_check
      _
    $region19: #{tpu_custom_call.1} parent=1 // pred_check_branch
      %32 = sbr.rel (0) target = $region21
    $region20: #{tpu_custom_call.1} parent=1 // pred_region
      _
    $region21: #{tpu_custom_call.1} parent=1 // pred_fallthru
      _
    // Predicated region
    $region22: #{tpu_custom_call.1} parent=1 // pred_check
      _
    $region23: #{tpu_custom_call.1} parent=1 // pred_check_branch
      %34 = sbr.rel (0) target = $region25
    $region24: #{tpu_custom_call.1} parent=1 // pred_region
      _
    $region25: #{tpu_custom_call.1} parent=1 // pred_fallthru
      _
    // Predicated region
    $region26: #{tpu_custom_call.1} parent=1 // pred_check
      _
    $region27: #{tpu_custom_call.1} parent=1 // pred_check_branch
      %36 = sbr.rel (0) target = $region29
    $region28: #{tpu_custom_call.1} parent=1 // pred_region
      %37 = dma.done [#allocation5], 512
    $region29: #{tpu_custom_call.1} parent=1 // pred_fallthru
      _
    %p39 = scmp.eq.s32.totalorder 0, 0
    // Predicated region
    $region30: #{tpu_custom_call.1} parent=1 // pred_check
      %p40 = pneg %p39
    $region31: #{tpu_custom_call.1} parent=1 // pred_check_branch
      %42 = sbr.rel (%p40) target = $region33
    $region32: #{tpu_custom_call.1} parent=1 // pred_region
      %43 = vst [vmem:[#allocation2] sm:$0xff] 0.0
      %44 = vst [vmem:[#allocation2 + $0x8] sm:$0xff] 0.0
      %45 = vst [vmem:[#allocation2 + $0x10] sm:$0xff] 0.0
      %46 = vst [vmem:[#allocation2 + $0x18] sm:$0xff] 0.0
      %47 = vst [vmem:[#allocation2 + $0x20] sm:$0xff] 0.0
      %48 = vst [vmem:[#allocation2 + $0x28] sm:$0xff] 0.0
      %49 = vst [vmem:[#allocation2 + $0x30] sm:$0xff] 0.0
      %50 = vst [vmem:[#allocation2 + $0x38] sm:$0xff] 0.0
      %51 = vst [vmem:[#allocation2 + $0x40] sm:$0xff] 0.0
      %52 = vst [vmem:[#allocation2 + $0x48] sm:$0xff] 0.0
      %53 = vst [vmem:[#allocation2 + $0x50] sm:$0xff] 0.0
      %54 = vst [vmem:[#allocation2 + $0x58] sm:$0xff] 0.0
      %55 = vst [vmem:[#allocation2 + $0x60] sm:$0xff] 0.0
      %56 = vst [vmem:[#allocation2 + $0x68] sm:$0xff] 0.0
      %57 = vst [vmem:[#allocation2 + $0x70] sm:$0xff] 0.0
      %58 = vst [vmem:[#allocation2 + $0x78] sm:$0xff] 0.0
    $region33: #{tpu_custom_call.1} parent=1 // pred_fallthru
      _
    %v59 = vld [vmem:[#allocation4] sm:$0xff]
    %v60 = vld [vmem:[#allocation4 + $0x8] sm:$0xff]
    %v61 = vld [vmem:[#allocation4 + $0x10] sm:$0xff]
    %v62 = vld [vmem:[#allocation4 + $0x18] sm:$0xff]
    %v63 = vunpack.c.l.s8.bf16 %v59
    %v64 = vunpack.c.h.s8.bf16 %v59
    %v65 = vunpack.c.l.s8.bf16 %v60
    %v66 = vunpack.c.h.s8.bf16 %v60
    %v67 = vunpack.c.l.s8.bf16 %v61
    %v68 = vunpack.c.h.s8.bf16 %v61
    %v69 = vunpack.c.l.s8.bf16 %v62
    %v70 = vunpack.c.h.s8.bf16 %v62
    %v71 = vld [vmem:[#allocation2] sm:$0xff]
    %v72 = vld [vmem:[#allocation2 + $0x8] sm:$0xff]
    %v73 = vld [vmem:[#allocation2 + $0x10] sm:$0xff]
    %v74 = vld [vmem:[#allocation2 + $0x18] sm:$0xff]
    %v75 = vld [vmem:[#allocation2 + $0x20] sm:$0xff]
    %v76 = vld [vmem:[#allocation2 + $0x28] sm:$0xff]
    %v77 = vld [vmem:[#allocation2 + $0x30] sm:$0xff]
    %v78 = vld [vmem:[#allocation2 + $0x38] sm:$0xff]
    %v79 = vld [vmem:[#allocation2 + $0x40] sm:$0xff]
    %v80 = vld [vmem:[#allocation2 + $0x48] sm:$0xff]
    %v81 = vld [vmem:[#allocation2 + $0x50] sm:$0xff]
    %v82 = vld [vmem:[#allocation2 + $0x58] sm:$0xff]
    %v83 = vld [vmem:[#allocation2 + $0x60] sm:$0xff]
    %v84 = vld [vmem:[#allocation2 + $0x68] sm:$0xff]
    %v85 = vld [vmem:[#allocation2 + $0x70] sm:$0xff]
    %v86 = vld [vmem:[#allocation2 + $0x78] sm:$0xff]
    %v87 = vld [vmem:[%s1] sm:$0xf]
    %v88 = vld [vmem:[%s1 + $0x4] sm:$0xf]
    %v89 = vld [vmem:[%s1 + $0x8] sm:$0xf]
    %v90 = vld [vmem:[%s1 + $0xc] sm:$0xf]
    %v91 = vld [vmem:[%s1 + $0x10] sm:$0xf]
    %v92 = vld [vmem:[%s1 + $0x14] sm:$0xf]
    %v93 = vld [vmem:[%s1 + $0x18] sm:$0xf]
    %v94 = vld [vmem:[%s1 + $0x1c] sm:$0xf]
    %v95 = vld [vmem:[%s1 + $0x20] sm:$0xf]
    %v96 = vld [vmem:[%s1 + $0x24] sm:$0xf]
    %v97 = vld [vmem:[%s1 + $0x28] sm:$0xf]
    %v98 = vld [vmem:[%s1 + $0x2c] sm:$0xf]
    %v99 = vld [vmem:[%s1 + $0x30] sm:$0xf]
    %v100 = vld [vmem:[%s1 + $0x34] sm:$0xf]
    %v101 = vld [vmem:[%s1 + $0x38] sm:$0xf]
    %v102 = vld [vmem:[%s1 + $0x3c] sm:$0xf]
    %v119 = vunpack.c.l.b16 %v87
    %v120 = vunpack.c.l.b16 %v88
    %v121 = vunpack.c.l.b16 %v89
    %v122 = vunpack.c.l.b16 %v90
    %v123 = vunpack.c.l.b16 %v91
    %v124 = vunpack.c.l.b16 %v92
    %v125 = vunpack.c.l.b16 %v93
    %v126 = vunpack.c.l.b16 %v94
    %v127 = vunpack.c.l.b16 %v95
    %v128 = vunpack.c.l.b16 %v96
    %v129 = vunpack.c.l.b16 %v97
    %v130 = vunpack.c.l.b16 %v98
    %v131 = vunpack.c.l.b16 %v99
    %v132 = vunpack.c.l.b16 %v100
    %v133 = vunpack.c.l.b16 %v101
    %v134 = vunpack.c.l.b16 %v102
    %v135 = vpack.c.b16 %v120, %v119
    %v136 = vpack.c.b16 %v122, %v121
    %v137 = vpack.c.b16 %v124, %v123
    %v138 = vpack.c.b16 %v126, %v125
    %v139 = vpack.c.b16 %v128, %v127
    %v140 = vpack.c.b16 %v130, %v129
    %v141 = vpack.c.b16 %v132, %v131
    %v142 = vpack.c.b16 %v134, %v133
    %151 = vmatprep.subr.bf16.mxu0 0
    %152 = vmatpush1.bf16.msra.mxu0 %v135
    %153 = vmatprep.subr.bf16.mxu0 0
    %154 = vmatpush1.bf16.msra.mxu0 %v136
    %155 = vmatprep.subr.bf16.mxu0 0
    %156 = vmatpush1.bf16.msra.mxu0 %v137
    %157 = vmatprep.subr.bf16.mxu0 0
    %158 = vmatpush1.bf16.msra.mxu0 %v138
    %159 = vmatprep.subr.bf16.mxu0 0
    %160 = vmatpush1.bf16.msra.mxu0 %v139
    %161 = vmatprep.subr.bf16.mxu0 0
    %162 = vmatpush1.bf16.msra.mxu0 %v140
    %163 = vmatprep.subr.bf16.mxu0 0
    %164 = vmatpush1.bf16.msra.mxu0 %v141
    %165 = vmatprep.subr.bf16.mxu0 0
    %166 = vmatpush1.bf16.msra.mxu0 %v142
    %167 = vmatprep.subr.bf16.mxu0 0
    %168 = vmatpush1.bf16.msra.mxu0 0
    %169 = vmatprep.subr.bf16.mxu0 0
    %170 = vmatpush1.bf16.msra.mxu0 0
    %171 = vmatprep.subr.bf16.mxu0 0
    %172 = vmatpush1.bf16.msra.mxu0 0
    %173 = vmatprep.subr.bf16.mxu0 0
    %174 = vmatpush1.bf16.msra.mxu0 0
    %175 = vmatprep.subr.bf16.mxu0 0
    %176 = vmatpush1.bf16.msra.mxu0 0
    %177 = vmatprep.subr.bf16.mxu0 0
    %178 = vmatpush1.bf16.msra.mxu0 0
    %179 = vmatprep.subr.bf16.mxu0 0
    %180 = vmatpush1.bf16.msra.mxu0 0
    %181 = vmatprep.subr.bf16.mxu0 0
    %182 = vmatpush1.bf16.msra.mxu0 0
    %183 = vmatprep.mubr.bf16.mxu0 0
    %184 = vmatmul.mubr.bf16.gmra.mrb[0].mxu0 %v63
    %v185 = vpop.f32.mrb[0].mxu0
    %v186 = vadd.f32 0.0, %v185
    %v187 = vpop.f32.mrb[0].mxu0
    %v188 = vpop.f32.mrb[0].mxu0
    %v189 = vadd.f32 0.0, %v188
    %v190 = vpop.f32.mrb[0].mxu0
    %191 = vmatprep.mubr.bf16.mxu0 0
    %192 = vmatmul.mubr.bf16.gmra.mrb[0].mxu0 %v64
    %v193 = vpop.f32.mrb[0].mxu0
    %v194 = vadd.f32 0.0, %v193
    %v195 = vpop.f32.mrb[0].mxu0
    %v196 = vpop.f32.mrb[0].mxu0
    %v197 = vadd.f32 0.0, %v196
    %v198 = vpop.f32.mrb[0].mxu0
    %199 = vmatprep.mubr.bf16.mxu0 0
    %200 = vmatmul.mubr.bf16.gmra.mrb[0].mxu0 %v65
    %v201 = vpop.f32.mrb[0].mxu0
    %v202 = vadd.f32 0.0, %v201
    %v203 = vpop.f32.mrb[0].mxu0
    %v204 = vpop.f32.mrb[0].mxu0
    %v205 = vadd.f32 0.0, %v204
    %v206 = vpop.f32.mrb[0].mxu0
    %207 = vmatprep.mubr.bf16.mxu0 0
    %208 = vmatmul.mubr.bf16.gmra.mrb[0].mxu0 %v66
    %v209 = vpop.f32.mrb[0].mxu0
    %v210 = vadd.f32 0.0, %v209
    %v211 = vpop.f32.mrb[0].mxu0
    %v212 = vpop.f32.mrb[0].mxu0
    %v213 = vadd.f32 0.0, %v212
    %v214 = vpop.f32.mrb[0].mxu0
    %215 = vmatprep.mubr.bf16.mxu0 0
    %216 = vmatmul.mubr.bf16.gmra.mrb[0].mxu0 %v67
    %v217 = vpop.f32.mrb[0].mxu0
    %v218 = vadd.f32 0.0, %v217
    %v219 = vpop.f32.mrb[0].mxu0
    %v220 = vpop.f32.mrb[0].mxu0
    %v221 = vadd.f32 0.0, %v220
    %v222 = vpop.f32.mrb[0].mxu0
    %223 = vmatprep.mubr.bf16.mxu0 0
    %224 = vmatmul.mubr.bf16.gmra.mrb[0].mxu0 %v68
    %v225 = vpop.f32.mrb[0].mxu0
    %v226 = vadd.f32 0.0, %v225
    %v227 = vpop.f32.mrb[0].mxu0
    %v228 = vpop.f32.mrb[0].mxu0
    %v229 = vadd.f32 0.0, %v228
    %v230 = vpop.f32.mrb[0].mxu0
    %231 = vmatprep.mubr.bf16.mxu0 0
    %232 = vmatmul.mubr.bf16.gmra.mrb[0].mxu0 %v69
    %v233 = vpop.f32.mrb[0].mxu0
    %v234 = vadd.f32 0.0, %v233
    %v235 = vpop.f32.mrb[0].mxu0
    %v236 = vpop.f32.mrb[0].mxu0
    %v237 = vadd.f32 0.0, %v236
    %v238 = vpop.f32.mrb[0].mxu0
    %239 = vmatprep.mubr.bf16.mxu0 0
    %240 = vmatmul.mubr.bf16.gmra.mrb[0].mxu0 %v70
    %v241 = vpop.f32.mrb[0].mxu0
    %v242 = vadd.f32 0.0, %v241
    %v243 = vpop.f32.mrb[0].mxu0
    %v244 = vpop.f32.mrb[0].mxu0
    %v245 = vadd.f32 0.0, %v244
    %v246 = vpop.f32.mrb[0].mxu0
    %247 = vdwg.mxu0
    %v248 = vadd.f32 %v71, %v186
    %v249 = vadd.f32 %v72, %v189
    %v250 = vadd.f32 %v73, %v194
    %v251 = vadd.f32 %v74, %v197
    %v252 = vadd.f32 %v75, %v202
    %v253 = vadd.f32 %v76, %v205
    %v254 = vadd.f32 %v77, %v210
    %v255 = vadd.f32 %v78, %v213
    %v256 = vadd.f32 %v79, %v218
    %v257 = vadd.f32 %v80, %v221
    %v258 = vadd.f32 %v81, %v226
    %v259 = vadd.f32 %v82, %v229
    %v260 = vadd.f32 %v83, %v234
    %v261 = vadd.f32 %v84, %v237
    %v262 = vadd.f32 %v85, %v242
    %v263 = vadd.f32 %v86, %v245
    %264 = vst [vmem:[#allocation2] sm:$0xff] %v248
    %265 = vst [vmem:[#allocation2 + $0x8] sm:$0xff] %v249
    %266 = vst [vmem:[#allocation2 + $0x10] sm:$0xff] %v250
    %267 = vst [vmem:[#allocation2 + $0x18] sm:$0xff] %v251
    %268 = vst [vmem:[#allocation2 + $0x20] sm:$0xff] %v252
    %269 = vst [vmem:[#allocation2 + $0x28] sm:$0xff] %v253
    %270 = vst [vmem:[#allocation2 + $0x30] sm:$0xff] %v254
    %271 = vst [vmem:[#allocation2 + $0x38] sm:$0xff] %v255
    %272 = vst [vmem:[#allocation2 + $0x40] sm:$0xff] %v256
    %273 = vst [vmem:[#allocation2 + $0x48] sm:$0xff] %v257
    %274 = vst [vmem:[#allocation2 + $0x50] sm:$0xff] %v258
    %275 = vst [vmem:[#allocation2 + $0x58] sm:$0xff] %v259
    %276 = vst [vmem:[#allocation2 + $0x60] sm:$0xff] %v260
    %277 = vst [vmem:[#allocation2 + $0x68] sm:$0xff] %v261
    %278 = vst [vmem:[#allocation2 + $0x70] sm:$0xff] %v262
    %279 = vst [vmem:[#allocation2 + $0x78] sm:$0xff] %v263
    // Predicated region
    $region34: #{tpu_custom_call.1} parent=1 // pred_check
      %p280 = pneg %p39
    $region35: #{tpu_custom_call.1} parent=1 // pred_check_branch
      %282 = sbr.rel (%p280) target = $region37
    $region36: #{tpu_custom_call.1} parent=1 // pred_region
      %v283 = vld [vmem:[#allocation2] sm:$0xff]
      %v284 = vld [vmem:[#allocation2 + $0x8] sm:$0xff]
      %v285 = vld [vmem:[#allocation2 + $0x10] sm:$0xff]
      %v286 = vld [vmem:[#allocation2 + $0x18] sm:$0xff]
      %v287 = vld [vmem:[#allocation2 + $0x20] sm:$0xff]
      %v288 = vld [vmem:[#allocation2 + $0x28] sm:$0xff]
      %v289 = vld [vmem:[#allocation2 + $0x30] sm:$0xff]
      %v290 = vld [vmem:[#allocation2 + $0x38] sm:$0xff]
      %v291 = vld [vmem:[#allocation2 + $0x40] sm:$0xff]
      %v292 = vld [vmem:[#allocation2 + $0x48] sm:$0xff]
      %v293 = vld [vmem:[#allocation2 + $0x50] sm:$0xff]
      %v294 = vld [vmem:[#allocation2 + $0x58] sm:$0xff]
      %v295 = vld [vmem:[#allocation2 + $0x60] sm:$0xff]
      %v296 = vld [vmem:[#allocation2 + $0x68] sm:$0xff]
      %v297 = vld [vmem:[#allocation2 + $0x70] sm:$0xff]
      %v298 = vld [vmem:[#allocation2 + $0x78] sm:$0xff]
      %vm299 = vcmp.gt.f32.partialorder %v283, 0.0
      %vm300 = vcmp.gt.f32.partialorder %v284, 0.0
      %vm301 = vcmp.gt.f32.partialorder %v285, 0.0
      %vm302 = vcmp.gt.f32.partialorder %v286, 0.0
      %vm303 = vcmp.gt.f32.partialorder %v287, 0.0
      %vm304 = vcmp.gt.f32.partialorder %v288, 0.0
      %vm305 = vcmp.gt.f32.partialorder %v289, 0.0
      %vm306 = vcmp.gt.f32.partialorder %v290, 0.0
      %vm307 = vcmp.gt.f32.partialorder %v291, 0.0
      %vm308 = vcmp.gt.f32.partialorder %v292, 0.0
      %vm309 = vcmp.gt.f32.partialorder %v293, 0.0
      %vm310 = vcmp.gt.f32.partialorder %v294, 0.0
      %vm311 = vcmp.gt.f32.partialorder %v295, 0.0
      %vm312 = vcmp.gt.f32.partialorder %v296, 0.0
      %vm313 = vcmp.gt.f32.partialorder %v297, 0.0
      %vm314 = vcmp.gt.f32.partialorder %v298, 0.0
      %v315 = vmax.f32 %v283, 1.0
      %v316 = vmax.f32 %v284, 1.0
      %v317 = vmax.f32 %v285, 1.0
      %v318 = vmax.f32 %v286, 1.0
      %v319 = vmax.f32 %v287, 1.0
      %v320 = vmax.f32 %v288, 1.0
      %v321 = vmax.f32 %v289, 1.0
      %v322 = vmax.f32 %v290, 1.0
      %v323 = vmax.f32 %v291, 1.0
      %v324 = vmax.f32 %v292, 1.0
      %v325 = vmax.f32 %v293, 1.0
      %v326 = vmax.f32 %v294, 1.0
      %v327 = vmax.f32 %v295, 1.0
      %v328 = vmax.f32 %v296, 1.0
      %v329 = vmax.f32 %v297, 1.0
      %v330 = vmax.f32 %v298, 1.0
      %332 = vset.pattern.permute.xlu0 16
      %333 = vperm.xlu0 %332, %v315
      %v334 = vpop.permute.xlu0 %333
      %337 = vset.pattern.permute.xlu0 16
      %338 = vperm.xlu0 %337, %v316
      %v339 = vpop.permute.xlu0 %338
      %342 = vset.pattern.permute.xlu0 16
      %343 = vperm.xlu0 %342, %v317
      %v344 = vpop.permute.xlu0 %343
      %347 = vset.pattern.permute.xlu0 16
      %348 = vperm.xlu0 %347, %v318
      %v349 = vpop.permute.xlu0 %348
      %352 = vset.pattern.permute.xlu0 16
      %353 = vperm.xlu0 %352, %v319
      %v354 = vpop.permute.xlu0 %353
      %357 = vset.pattern.permute.xlu0 16
      %358 = vperm.xlu0 %357, %v320
      %v359 = vpop.permute.xlu0 %358
      %362 = vset.pattern.permute.xlu0 16
      %363 = vperm.xlu0 %362, %v321
      %v364 = vpop.permute.xlu0 %363
      %367 = vset.pattern.permute.xlu0 16
      %368 = vperm.xlu0 %367, %v322
      %v369 = vpop.permute.xlu0 %368
      %372 = vset.pattern.permute.xlu0 16
      %373 = vperm.xlu0 %372, %v323
      %v374 = vpop.permute.xlu0 %373
      %377 = vset.pattern.permute.xlu0 16
      %378 = vperm.xlu0 %377, %v324
      %v379 = vpop.permute.xlu0 %378
      %382 = vset.pattern.permute.xlu0 16
      %383 = vperm.xlu0 %382, %v325
      %v384 = vpop.permute.xlu0 %383
      %387 = vset.pattern.permute.xlu0 16
      %388 = vperm.xlu0 %387, %v326
      %v389 = vpop.permute.xlu0 %388
      %392 = vset.pattern.permute.xlu0 16
      %393 = vperm.xlu0 %392, %v327
      %v394 = vpop.permute.xlu0 %393
      %397 = vset.pattern.permute.xlu0 16
      %398 = vperm.xlu0 %397, %v328
      %v399 = vpop.permute.xlu0 %398
      %402 = vset.pattern.permute.xlu0 16
      %403 = vperm.xlu0 %402, %v329
      %v404 = vpop.permute.xlu0 %403
      %407 = vset.pattern.permute.xlu0 16
      %408 = vperm.xlu0 %407, %v330
      %v409 = vpop.permute.xlu0 %408
      %v411 = vrcp.pop %v334
      %v412 = vmul.f32 %v283, %v411
      %v413 = vrcp.pop %v339
      %v414 = vmul.f32 %v284, %v413
      %v415 = vrcp.pop %v344
      %v416 = vmul.f32 %v285, %v415
      %v417 = vrcp.pop %v349
      %v418 = vmul.f32 %v286, %v417
      %v419 = vrcp.pop %v354
      %v420 = vmul.f32 %v287, %v419
      %v421 = vrcp.pop %v359
      %v422 = vmul.f32 %v288, %v421
      %v423 = vrcp.pop %v364
      %v424 = vmul.f32 %v289, %v423
      %v425 = vrcp.pop %v369
      %v426 = vmul.f32 %v290, %v425
      %v427 = vrcp.pop %v374
      %v428 = vmul.f32 %v291, %v427
      %v429 = vrcp.pop %v379
      %v430 = vmul.f32 %v292, %v429
      %v431 = vrcp.pop %v384
      %v432 = vmul.f32 %v293, %v431
      %v433 = vrcp.pop %v389
      %v434 = vmul.f32 %v294, %v433
      %v435 = vrcp.pop %v394
      %v436 = vmul.f32 %v295, %v435
      %v437 = vrcp.pop %v399
      %v438 = vmul.f32 %v296, %v437
      %v439 = vrcp.pop %v404
      %v440 = vmul.f32 %v297, %v439
      %v441 = vrcp.pop %v409
      %v442 = vmul.f32 %v298, %v441
      %v443 = vsel %vm299, 1, 0
      %v444 = vsel %vm300, 1, 0
      %v445 = vsel %vm301, 1, 0
      %v446 = vsel %vm302, 1, 0
      %v447 = vsel %vm303, 1, 0
      %v448 = vsel %vm304, 1, 0
      %v449 = vsel %vm305, 1, 0
      %v450 = vsel %vm306, 1, 0
      %v451 = vsel %vm307, 1, 0
      %v452 = vsel %vm308, 1, 0
      %v453 = vsel %vm309, 1, 0
      %v454 = vsel %vm310, 1, 0
      %v455 = vsel %vm311, 1, 0
      %v456 = vsel %vm312, 1, 0
      %v457 = vsel %vm313, 1, 0
      %v458 = vsel %vm314, 1, 0
      %459 = vset.pattern.permute.xlu0 16
      %460 = vperm.xlu0 %459, %v443
      %v461 = vpop.permute.xlu0 %460
      %462 = vset.pattern.permute.xlu0 16
      %463 = vperm.xlu0 %462, %v444
      %v464 = vpop.permute.xlu0 %463
      %465 = vset.pattern.permute.xlu0 16
      %466 = vperm.xlu0 %465, %v445
      %v467 = vpop.permute.xlu0 %466
      %468 = vset.pattern.permute.xlu0 16
      %469 = vperm.xlu0 %468, %v446
      %v470 = vpop.permute.xlu0 %469
      %471 = vset.pattern.permute.xlu0 16
      %472 = vperm.xlu0 %471, %v447
      %v473 = vpop.permute.xlu0 %472
      %474 = vset.pattern.permute.xlu0 16
      %475 = vperm.xlu0 %474, %v448
      %v476 = vpop.permute.xlu0 %475
      %477 = vset.pattern.permute.xlu0 16
      %478 = vperm.xlu0 %477, %v449
      %v479 = vpop.permute.xlu0 %478
      %480 = vset.pattern.permute.xlu0 16
      %481 = vperm.xlu0 %480, %v450
      %v482 = vpop.permute.xlu0 %481
      %483 = vset.pattern.permute.xlu0 16
      %484 = vperm.xlu0 %483, %v451
      %v485 = vpop.permute.xlu0 %484
      %486 = vset.pattern.permute.xlu0 16
      %487 = vperm.xlu0 %486, %v452
      %v488 = vpop.permute.xlu0 %487
      %489 = vset.pattern.permute.xlu0 16
      %490 = vperm.xlu0 %489, %v453
      %v491 = vpop.permute.xlu0 %490
      %492 = vset.pattern.permute.xlu0 16
      %493 = vperm.xlu0 %492, %v454
      %v494 = vpop.permute.xlu0 %493
      %495 = vset.pattern.permute.xlu0 16
      %496 = vperm.xlu0 %495, %v455
      %v497 = vpop.permute.xlu0 %496
      %498 = vset.pattern.permute.xlu0 16
      %499 = vperm.xlu0 %498, %v456
      %v500 = vpop.permute.xlu0 %499
      %501 = vset.pattern.permute.xlu0 16
      %502 = vperm.xlu0 %501, %v457
      %v503 = vpop.permute.xlu0 %502
      %504 = vset.pattern.permute.xlu0 16
      %505 = vperm.xlu0 %504, %v458
      %v506 = vpop.permute.xlu0 %505
      %vm507 = vcmp.eq.s32.totalorder %v461, 1
      %vm508 = vcmp.eq.s32.totalorder %v464, 1
      %vm509 = vcmp.eq.s32.totalorder %v467, 1
      %vm510 = vcmp.eq.s32.totalorder %v470, 1
      %vm511 = vcmp.eq.s32.totalorder %v473, 1
      %vm512 = vcmp.eq.s32.totalorder %v476, 1
      %vm513 = vcmp.eq.s32.totalorder %v479, 1
      %vm514 = vcmp.eq.s32.totalorder %v482, 1
      %vm515 = vcmp.eq.s32.totalorder %v485, 1
      %vm516 = vcmp.eq.s32.totalorder %v488, 1
      %vm517 = vcmp.eq.s32.totalorder %v491, 1
      %vm518 = vcmp.eq.s32.totalorder %v494, 1
      %vm519 = vcmp.eq.s32.totalorder %v497, 1
      %vm520 = vcmp.eq.s32.totalorder %v500, 1
      %vm521 = vcmp.eq.s32.totalorder %v503, 1
      %vm522 = vcmp.eq.s32.totalorder %v506, 1
      %v523 = vsel %vm507, %v412, 0.0
      %v524 = vsel %vm508, %v414, 0.0
      %v525 = vsel %vm509, %v416, 0.0
      %v526 = vsel %vm510, %v418, 0.0
      %v527 = vsel %vm511, %v420, 0.0
      %v528 = vsel %vm512, %v422, 0.0
      %v529 = vsel %vm513, %v424, 0.0
      %v530 = vsel %vm514, %v426, 0.0
      %v531 = vsel %vm515, %v428, 0.0
      %v532 = vsel %vm516, %v430, 0.0
      %v533 = vsel %vm517, %v432, 0.0
      %v534 = vsel %vm518, %v434, 0.0
      %v535 = vsel %vm519, %v436, 0.0
      %v536 = vsel %vm520, %v438, 0.0
      %v537 = vsel %vm521, %v440, 0.0
      %v538 = vsel %vm522, %v442, 0.0
      %v539 = vld [vmem:[%s2] sm:$0xf]
      %v540 = vld [vmem:[%s2 + $0x4] sm:$0xf]
      %v541 = vld [vmem:[%s2 + $0x8] sm:$0xf]
      %v542 = vld [vmem:[%s2 + $0xc] sm:$0xf]
      %v543 = vld [vmem:[%s2 + $0x10] sm:$0xf]
      %v544 = vld [vmem:[%s2 + $0x14] sm:$0xf]
      %v545 = vld [vmem:[%s2 + $0x18] sm:$0xf]
      %v546 = vld [vmem:[%s2 + $0x1c] sm:$0xf]
      %v547 = vld [vmem:[%s2 + $0x20] sm:$0xf]
      %v548 = vld [vmem:[%s2 + $0x24] sm:$0xf]
      %v549 = vld [vmem:[%s2 + $0x28] sm:$0xf]
      %v550 = vld [vmem:[%s2 + $0x2c] sm:$0xf]
      %v551 = vld [vmem:[%s2 + $0x30] sm:$0xf]
      %v552 = vld [vmem:[%s2 + $0x34] sm:$0xf]
      %v553 = vld [vmem:[%s2 + $0x38] sm:$0xf]
      %v554 = vld [vmem:[%s2 + $0x3c] sm:$0xf]
      %v555 = vld [vmem:[%s3] sm:$0xf]
      %v556 = vld [vmem:[%s3 + $0x4] sm:$0xf]
      %v557 = vpack.c.bf16 %v524, %v523
      %v558 = vpack.c.bf16 %v526, %v525
      %v559 = vpack.c.bf16 %v528, %v527
      %v560 = vpack.c.bf16 %v530, %v529
      %v561 = vpack.c.bf16 %v532, %v531
      %v562 = vpack.c.bf16 %v534, %v533
      %v563 = vpack.c.bf16 %v536, %v535
      %v564 = vpack.c.bf16 %v538, %v537
      %v565 = vld [vmem:[%s4] sm:$0xf]
      %v566 = vld [vmem:[%s4 + $0x4] sm:$0xf]
      %v569 = vunpack.c.l.b16 %v565
      %v570 = vunpack.c.l.b16 %v566
      %v571 = vpack.c.b16 %v570, %v569
      %vm573 = vcmask 130048
      %v575 = vsel %vm573, %v557, 0
      %v578 = vsel %vm573, %v558, 0
      %v581 = vsel %vm573, %v559, 0
      %v584 = vsel %vm573, %v560, 0
      %v587 = vsel %vm573, %v561, 0
      %v590 = vsel %vm573, %v562, 0
      %v593 = vsel %vm573, %v563, 0
      %v596 = vsel %vm573, %v564, 0
      %598 = vmatprep.subr.bf16.mxu0 0
      %599 = vmatpush1.bf16.msra.mxu0 %v571
      %600 = vmatprep.subr.bf16.mxu0 0
      %601 = vmatpush1.bf16.msra.mxu0 0
      %602 = vmatprep.subr.bf16.mxu0 0
      %603 = vmatpush1.bf16.msra.mxu0 0
      %604 = vmatprep.subr.bf16.mxu0 0
      %605 = vmatpush1.bf16.msra.mxu0 0
      %606 = vmatprep.subr.bf16.mxu0 0
      %607 = vmatpush1.bf16.msra.mxu0 0
      %608 = vmatprep.subr.bf16.mxu0 0
      %609 = vmatpush1.bf16.msra.mxu0 0
      %610 = vmatprep.subr.bf16.mxu0 0
      %611 = vmatpush1.bf16.msra.mxu0 0
      %612 = vmatprep.subr.bf16.mxu0 0
      %613 = vmatpush1.bf16.msra.mxu0 0
      %614 = vmatprep.subr.bf16.mxu0 0
      %615 = vmatpush1.bf16.msra.mxu0 0
      %616 = vmatprep.subr.bf16.mxu0 0
      %617 = vmatpush1.bf16.msra.mxu0 0
      %618 = vmatprep.subr.bf16.mxu0 0
      %619 = vmatpush1.bf16.msra.mxu0 0
      %620 = vmatprep.subr.bf16.mxu0 0
      %621 = vmatpush1.bf16.msra.mxu0 0
      %622 = vmatprep.subr.bf16.mxu0 0
      %623 = vmatpush1.bf16.msra.mxu0 0
      %624 = vmatprep.subr.bf16.mxu0 0
      %625 = vmatpush1.bf16.msra.mxu0 0
      %626 = vmatprep.subr.bf16.mxu0 0
      %627 = vmatpush1.bf16.msra.mxu0 0
      %628 = vmatprep.subr.bf16.mxu0 0
      %629 = vmatpush1.bf16.msra.mxu0 0
      %630 = vmatprep.mubr.bf16.mxu0 0
      %631 = vmatmul.mubr.bf16.gmra.mrb[0].mxu0 %v575
      %v632 = vpop.f32.mrb[0].mxu0
      %v633 = vadd.f32 0.0, %v632
      %v634 = vpop.f32.mrb[0].mxu0
      %v635 = vpop.f32.mrb[0].mxu0
      %v636 = vadd.f32 0.0, %v635
      %v637 = vpop.f32.mrb[0].mxu0
      %638 = vmatprep.mubr.bf16.mxu0 0
      %639 = vmatmul.mubr.bf16.gmra.mrb[0].mxu0 %v578
      %v640 = vpop.f32.mrb[0].mxu0
      %v641 = vadd.f32 0.0, %v640
      %v642 = vpop.f32.mrb[0].mxu0
      %v643 = vpop.f32.mrb[0].mxu0
      %v644 = vadd.f32 0.0, %v643
      %v645 = vpop.f32.mrb[0].mxu0
      %646 = vmatprep.mubr.bf16.mxu0 0
      %647 = vmatmul.mubr.bf16.gmra.mrb[0].mxu0 %v581
      %v648 = vpop.f32.mrb[0].mxu0
      %v649 = vadd.f32 0.0, %v648
      %v650 = vpop.f32.mrb[0].mxu0
      %v651 = vpop.f32.mrb[0].mxu0
      %v652 = vadd.f32 0.0, %v651
      %v653 = vpop.f32.mrb[0].mxu0
      %654 = vmatprep.mubr.bf16.mxu0 0
      %655 = vmatmul.mubr.bf16.gmra.mrb[0].mxu0 %v584
      %v656 = vpop.f32.mrb[0].mxu0
      %v657 = vadd.f32 0.0, %v656
      %v658 = vpop.f32.mrb[0].mxu0
      %v659 = vpop.f32.mrb[0].mxu0
      %v660 = vadd.f32 0.0, %v659
      %v661 = vpop.f32.mrb[0].mxu0
      %662 = vmatprep.mubr.bf16.mxu0 0
      %663 = vmatmul.mubr.bf16.gmra.mrb[0].mxu0 %v587
      %v664 = vpop.f32.mrb[0].mxu0
      %v665 = vadd.f32 0.0, %v664
      %v666 = vpop.f32.mrb[0].mxu0
      %v667 = vpop.f32.mrb[0].mxu0
      %v668 = vadd.f32 0.0, %v667
      %v669 = vpop.f32.mrb[0].mxu0
      %670 = vmatprep.mubr.bf16.mxu0 0
      %671 = vmatmul.mubr.bf16.gmra.mrb[0].mxu0 %v590
      %v672 = vpop.f32.mrb[0].mxu0
      %v673 = vadd.f32 0.0, %v672
      %v674 = vpop.f32.mrb[0].mxu0
      %v675 = vpop.f32.mrb[0].mxu0
      %v676 = vadd.f32 0.0, %v675
      %v677 = vpop.f32.mrb[0].mxu0
      %678 = vmatprep.mubr.bf16.mxu0 0
      %679 = vmatmul.mubr.bf16.gmra.mrb[0].mxu0 %v593
      %v680 = vpop.f32.mrb[0].mxu0
      %v681 = vadd.f32 0.0, %v680
      %v682 = vpop.f32.mrb[0].mxu0
      %v683 = vpop.f32.mrb[0].mxu0
      %v684 = vadd.f32 0.0, %v683
      %v685 = vpop.f32.mrb[0].mxu0
      %686 = vmatprep.mubr.bf16.mxu0 0
      %687 = vmatmul.mubr.bf16.gmra.mrb[0].mxu0 %v596
      %v688 = vpop.f32.mrb[0].mxu0
      %v689 = vadd.f32 0.0, %v688
      %v690 = vpop.f32.mrb[0].mxu0
      %v691 = vpop.f32.mrb[0].mxu0
      %v692 = vadd.f32 0.0, %v691
      %v693 = vpop.f32.mrb[0].mxu0
      %694 = vdwg.mxu0
      %v711 = vunpack.c.l.b16 %v539
      %v712 = vunpack.c.l.b16 %v540
      %v713 = vunpack.c.l.b16 %v541
      %v714 = vunpack.c.l.b16 %v542
      %v715 = vunpack.c.l.b16 %v543
      %v716 = vunpack.c.l.b16 %v544
      %v717 = vunpack.c.l.b16 %v545
      %v718 = vunpack.c.l.b16 %v546
      %v719 = vunpack.c.l.b16 %v547
      %v720 = vunpack.c.l.b16 %v548
      %v721 = vunpack.c.l.b16 %v549
      %v722 = vunpack.c.l.b16 %v550
      %v723 = vunpack.c.l.b16 %v551
      %v724 = vunpack.c.l.b16 %v552
      %v725 = vunpack.c.l.b16 %v553
      %v726 = vunpack.c.l.b16 %v554
      %v727 = vpack.c.b16 %v712, %v711
      %v728 = vpack.c.b16 %v714, %v713
      %v729 = vpack.c.b16 %v716, %v715
      %v730 = vpack.c.b16 %v718, %v717
      %v731 = vpack.c.b16 %v720, %v719
      %v732 = vpack.c.b16 %v722, %v721
      %v733 = vpack.c.b16 %v724, %v723
      %v734 = vpack.c.b16 %v726, %v725
      %v737 = vunpack.c.l.b16 %v555
      %v738 = vunpack.c.l.b16 %v556
      %v739 = vpack.c.b16 %v738, %v737
      %v742 = vsel %vm573, %v727, 0
      %v745 = vsel %vm573, %v728, 0
      %v748 = vsel %vm573, %v729, 0
      %v751 = vsel %vm573, %v730, 0
      %v754 = vsel %vm573, %v731, 0
      %v757 = vsel %vm573, %v732, 0
      %v760 = vsel %vm573, %v733, 0
      %v763 = vsel %vm573, %v734, 0
      %765 = vmatprep.subr.bf16.mxu0 0
      %766 = vmatpush1.bf16.msra.mxu0 %v739
      %767 = vmatprep.subr.bf16.mxu0 0
      %768 = vmatpush1.bf16.msra.mxu0 0
      %769 = vmatprep.subr.bf16.mxu0 0
      %770 = vmatpush1.bf16.msra.mxu0 0
      %771 = vmatprep.subr.bf16.mxu0 0
      %772 = vmatpush1.bf16.msra.mxu0 0
      %773 = vmatprep.subr.bf16.mxu0 0
      %774 = vmatpush1.bf16.msra.mxu0 0
      %775 = vmatprep.subr.bf16.mxu0 0
      %776 = vmatpush1.bf16.msra.mxu0 0
      %777 = vmatprep.subr.bf16.mxu0 0
      %778 = vmatpush1.bf16.msra.mxu0 0
      %779 = vmatprep.subr.bf16.mxu0 0
      %780 = vmatpush1.bf16.msra.mxu0 0
      %781 = vmatprep.subr.bf16.mxu0 0
      %782 = vmatpush1.bf16.msra.mxu0 0
      %783 = vmatprep.subr.bf16.mxu0 0
      %784 = vmatpush1.bf16.msra.mxu0 0
      %785 = vmatprep.subr.bf16.mxu0 0
      %786 = vmatpush1.bf16.msra.mxu0 0
      %787 = vmatprep.subr.bf16.mxu0 0
      %788 = vmatpush1.bf16.msra.mxu0 0
      %789 = vmatprep.subr.bf16.mxu0 0
      %790 = vmatpush1.bf16.msra.mxu0 0
      %791 = vmatprep.subr.bf16.mxu0 0
      %792 = vmatpush1.bf16.msra.mxu0 0
      %793 = vmatprep.subr.bf16.mxu0 0
      %794 = vmatpush1.bf16.msra.mxu0 0
      %795 = vmatprep.subr.bf16.mxu0 0
      %796 = vmatpush1.bf16.msra.mxu0 0
      %797 = vmatprep.mubr.bf16.mxu0 0
      %798 = vmatmul.mubr.bf16.gmra.mrb[0].mxu0 %v742
      %v799 = vpop.f32.mrb[0].mxu0
      %v800 = vadd.f32 %v633, %v799
      %v801 = vpop.f32.mrb[0].mxu0
      %v802 = vpop.f32.mrb[0].mxu0
      %v803 = vadd.f32 %v636, %v802
      %v804 = vpop.f32.mrb[0].mxu0
      %805 = vmatprep.mubr.bf16.mxu0 0
      %806 = vmatmul.mubr.bf16.gmra.mrb[0].mxu0 %v745
      %v807 = vpop.f32.mrb[0].mxu0
      %v808 = vadd.f32 %v641, %v807
      %v809 = vpop.f32.mrb[0].mxu0
      %v810 = vpop.f32.mrb[0].mxu0
      %v811 = vadd.f32 %v644, %v810
      %v812 = vpop.f32.mrb[0].mxu0
      %813 = vmatprep.mubr.bf16.mxu0 0
      %814 = vmatmul.mubr.bf16.gmra.mrb[0].mxu0 %v748
      %v815 = vpop.f32.mrb[0].mxu0
      %v816 = vadd.f32 %v649, %v815
      %v817 = vpop.f32.mrb[0].mxu0
      %v818 = vpop.f32.mrb[0].mxu0
      %v819 = vadd.f32 %v652, %v818
      %v820 = vpop.f32.mrb[0].mxu0
      %821 = vmatprep.mubr.bf16.mxu0 0
      %822 = vmatmul.mubr.bf16.gmra.mrb[0].mxu0 %v751
      %v823 = vpop.f32.mrb[0].mxu0
      %v824 = vadd.f32 %v657, %v823
      %v825 = vpop.f32.mrb[0].mxu0
      %v826 = vpop.f32.mrb[0].mxu0
      %v827 = vadd.f32 %v660, %v826
      %v828 = vpop.f32.mrb[0].mxu0
      %829 = vmatprep.mubr.bf16.mxu0 0
      %830 = vmatmul.mubr.bf16.gmra.mrb[0].mxu0 %v754
      %v831 = vpop.f32.mrb[0].mxu0
      %v832 = vadd.f32 %v665, %v831
      %v833 = vpop.f32.mrb[0].mxu0
      %v834 = vpop.f32.mrb[0].mxu0
      %v835 = vadd.f32 %v668, %v834
      %v836 = vpop.f32.mrb[0].mxu0
      %837 = vmatprep.mubr.bf16.mxu0 0
      %838 = vmatmul.mubr.bf16.gmra.mrb[0].mxu0 %v757
      %v839 = vpop.f32.mrb[0].mxu0
      %v840 = vadd.f32 %v673, %v839
      %v841 = vpop.f32.mrb[0].mxu0
      %v842 = vpop.f32.mrb[0].mxu0
      %v843 = vadd.f32 %v676, %v842
      %v844 = vpop.f32.mrb[0].mxu0
      %845 = vmatprep.mubr.bf16.mxu0 0
      %846 = vmatmul.mubr.bf16.gmra.mrb[0].mxu0 %v760
      %v847 = vpop.f32.mrb[0].mxu0
      %v848 = vadd.f32 %v681, %v847
      %v849 = vpop.f32.mrb[0].mxu0
      %v850 = vpop.f32.mrb[0].mxu0
      %v851 = vadd.f32 %v684, %v850
      %v852 = vpop.f32.mrb[0].mxu0
      %853 = vmatprep.mubr.bf16.mxu0 0
      %854 = vmatmul.mubr.bf16.gmra.mrb[0].mxu0 %v763
      %v855 = vpop.f32.mrb[0].mxu0
      %v856 = vadd.f32 %v689, %v855
      %v857 = vpop.f32.mrb[0].mxu0
      %v858 = vpop.f32.mrb[0].mxu0
      %v859 = vadd.f32 %v692, %v858
      %v860 = vpop.f32.mrb[0].mxu0
      %861 = vdwg.mxu0
      %v862 = vld [vmem:[%s5] sm:$0x1]
      %v864 = vlaneseq
      %v865 = vshrl.u32 %v864, 7
      %v866 = vsub.s32 0, %v865
      %v867 = vrot.slane %v862, %v866
      %v869 = vadd.f32 %v800, %v867
      %v870 = vadd.f32 %v803, %v867
      %v871 = vadd.f32 %v808, %v867
      %v872 = vadd.f32 %v811, %v867
      %v873 = vadd.f32 %v816, %v867
      %v874 = vadd.f32 %v819, %v867
      %v875 = vadd.f32 %v824, %v867
      %v876 = vadd.f32 %v827, %v867
      %v877 = vadd.f32 %v832, %v867
      %v878 = vadd.f32 %v835, %v867
      %v879 = vadd.f32 %v840, %v867
      %v880 = vadd.f32 %v843, %v867
      %v881 = vadd.f32 %v848, %v867
      %v882 = vadd.f32 %v851, %v867
      %v883 = vadd.f32 %v856, %v867
      %v884 = vadd.f32 %v859, %v867
      %885 = vst [vmem:[#allocation7] sm:$0xff] %v869
      %886 = vst [vmem:[#allocation7 + $0x8] sm:$0xff] %v870
      %887 = vst [vmem:[#allocation7 + $0x10] sm:$0xff] %v871
      %888 = vst [vmem:[#allocation7 + $0x18] sm:$0xff] %v872
      %889 = vst [vmem:[#allocation7 + $0x20] sm:$0xff] %v873
      %890 = vst [vmem:[#allocation7 + $0x28] sm:$0xff] %v874
      %891 = vst [vmem:[#allocation7 + $0x30] sm:$0xff] %v875
      %892 = vst [vmem:[#allocation7 + $0x38] sm:$0xff] %v876
      %893 = vst [vmem:[#allocation7 + $0x40] sm:$0xff] %v877
      %894 = vst [vmem:[#allocation7 + $0x48] sm:$0xff] %v878
      %895 = vst [vmem:[#allocation7 + $0x50] sm:$0xff] %v879
      %896 = vst [vmem:[#allocation7 + $0x58] sm:$0xff] %v880
      %897 = vst [vmem:[#allocation7 + $0x60] sm:$0xff] %v881
      %898 = vst [vmem:[#allocation7 + $0x68] sm:$0xff] %v882
      %899 = vst [vmem:[#allocation7 + $0x70] sm:$0xff] %v883
      %900 = vst [vmem:[#allocation7 + $0x78] sm:$0xff] %v884
    $region37: #{tpu_custom_call.1} parent=1 // pred_fallthru
      _
    // Predicated region
    $region38: #{tpu_custom_call.1} parent=1 // pred_check
      _
    $region39: #{tpu_custom_call.1} parent=1 // pred_check_branch
      %902 = sbr.rel (0) target = $region41
    $region40: #{tpu_custom_call.1} parent=1 // pred_region
      %s904 = ssub.s32 2048, 2048
      %905 = vsyncadd [#allocation6], %s904
      %s906 = sshll.u32 [#allocation7], 4
      %s907 = int_to_ptr.vmem [resolvable:$true] %s906
      %912 = dma.vmem_to_hbm [thread:$0]  %s907, 2048, %s6, [#allocation6], 128, 128, 8
    $region41: #{tpu_custom_call.1} parent=1 // pred_fallthru
      _
    // Predicated region
    $region42: #{tpu_custom_call.1} parent=1 // pred_check
      _
    $region43: #{tpu_custom_call.1} parent=1 // pred_check_branch
      %914 = sbr.rel (0) target = $region45
    $region44: #{tpu_custom_call.1} parent=1 // pred_region
      %915 = dma.done [#allocation6], 2048
    $region45: #{tpu_custom_call.1} parent=1 // pred_fallthru
      _
    %916 = vsyncpa [#allocation5], 1
    %917 = vsyncpa [#allocation6], 1

</llo_original>
